<compile_context>
chip_gen: v7x
topology: tpu7x:2x2x1
jax: 0.10.0
libtpu: 0.0.40
codegen_flags: <defaults>
</compile_context>

<pallas_src>
import jax
import jax.numpy as jnp
from jax.experimental import pallas as pl
from jax.experimental.pallas import tpu as pltpu

IN_DIM = 200
HID_DIM = 64
OUT_DIM = 10
TB_MAX = 1024  # rows per grid step; sized for v5e's 16 MiB scoped-VMEM default


def _mlp_kernel(x_ref, w1_ref, b1_ref, w2_ref, b2_ref, o_ref):
    # One (TB, 200) batch tile per grid step; weights/biases are VMEM-resident.
    x = x_ref[...].astype(jnp.float32)                                   # (TB, 200)
    h = jnp.dot(x, w1_ref[...], preferred_element_type=jnp.float32)      # (TB, 64)
    h = jnp.maximum(h + b1_ref[...], 0.0)                                # +bias, ReLU
    o = jnp.dot(h, w2_ref[...], preferred_element_type=jnp.float32)      # (TB, 10)
    o_ref[...] = o + b2_ref[...]                                         # +bias


def _round_up(n, m):
    return ((n + m - 1) // m) * m


def category_mlp_forward(category_info, w1, b1, w2, b2):
    """Pallas implementation of CategoryMLP.forward.

    category_info: shape (B, ...) whose trailing dims flatten to 200 (any dtype;
    the f32 cast happens inside the kernel, matching torch's `.float()`).
    Returns (B, 10) float32.
    """
    B = category_info.shape[0]
    x = category_info.reshape(B, -1)                       # x.view(B, -1)
    assert x.shape[1] == IN_DIM, f"expected flattened dim {IN_DIM}, got {x.shape[1]}"

    # Biases as (1, N): tiny, VMEM-resident, broadcast over the batch tile.
    b1_2d = b1.reshape(1, HID_DIM).astype(jnp.float32)
    b2_2d = b2.reshape(1, OUT_DIM).astype(jnp.float32)
    w1 = w1.astype(jnp.float32)
    w2 = w2.astype(jnp.float32)

    # Batch tile: multiple of 8 (sublane), capped for small-VMEM chips.
    tb = min(TB_MAX, _round_up(B, 8))
    grid = (pl.cdiv(B, tb),)

    x_bytes = x.size * x.dtype.itemsize
    w_bytes = (w1.size + w2.size + b1_2d.size + b2_2d.size) * 4
    out_bytes = B * OUT_DIM * 4
    cost = pl.CostEstimate(
        flops=B * (2 * IN_DIM * HID_DIM + 2 * HID_DIM * OUT_DIM),
        transcendentals=0,
        bytes_accessed=x_bytes + w_bytes + out_bytes,
    )

    return pl.pallas_call(
        _mlp_kernel,
        out_shape=jax.ShapeDtypeStruct((B, OUT_DIM), jnp.float32),
        grid=grid,
        in_specs=[
            # Streamed, double-buffered batch tile of x (native dtype).
            pl.BlockSpec((tb, IN_DIM), lambda i: (i, 0)),
            # Weights / biases: full-extent block, constant index -> fetched once.
            pl.BlockSpec((IN_DIM, HID_DIM), lambda i: (0, 0)),
            pl.BlockSpec((1, HID_DIM), lambda i: (0, 0)),
            pl.BlockSpec((HID_DIM, OUT_DIM), lambda i: (0, 0)),
            pl.BlockSpec((1, OUT_DIM), lambda i: (0, 0)),
        ],
        out_specs=pl.BlockSpec((tb, OUT_DIM), lambda i: (i, 0)),
        compiler_params=pltpu.CompilerParams(
            dimension_semantics=("parallel",),   # v7x: shard batch across 2 TCs
        ),
        cost_estimate=cost,
    )(x, w1, b1_2d, w2, b2_2d)


def init_params(key):
    """Deterministic init matching PyTorch nn.Linear default (U(-1/sqrt(fan_in), +))."""
    k1, k2, k3, k4 = jax.random.split(key, 4)
    bound1 = 1.0 / (IN_DIM ** 0.5)
    bound2 = 1.0 / (HID_DIM ** 0.5)
    w1 = jax.random.uniform(k1, (IN_DIM, HID_DIM), jnp.float32, -bound1, bound1)
    b1 = jax.random.uniform(k2, (HID_DIM,), jnp.float32, -bound1, bound1)
    w2 = jax.random.uniform(k3, (HID_DIM, OUT_DIM), jnp.float32, -bound2, bound2)
    b2 = jax.random.uniform(k4, (OUT_DIM,), jnp.float32, -bound2, bound2)
    return w1, b1, w2, b2


if __name__ == "__main__":
    key = jax.random.PRNGKey(0)
    k_params, k_x = jax.random.split(key)
    w1, b1, w2, b2 = init_params(k_params)

    B = 4
    category_info = jax.random.normal(k_x, (B, IN_DIM), jnp.float32)

    out = category_mlp_forward(category_info, w1, b1, w2, b2)
    out = jax.block_until_ready(out)

    # Reference check against plain JAX.
    xf = category_info.astype(jnp.float32).reshape(B, -1)
    ref = jnp.maximum(xf @ w1 + b1, 0.0) @ w2 + b2
    assert out.shape == (B, OUT_DIM)
    assert jnp.allclose(out, ref, atol=1e-4, rtol=1e-4)

    print("KERNEL_OK")
</pallas_src>

<mosaic_0001>
module attributes {stable_mosaic.version = 11 : i64} {
  func.func @_mlp_kernel(%arg0: i32, %arg1: memref<8x200xf32, #tpu.memory_space<vmem>>, %arg2: memref<200x64xf32, #tpu.memory_space<vmem>>, %arg3: memref<1x64xf32, #tpu.memory_space<vmem>>, %arg4: memref<64x10xf32, #tpu.memory_space<vmem>>, %arg5: memref<1x10xf32, #tpu.memory_space<vmem>>, %arg6: memref<8x10xf32, #tpu.memory_space<vmem>>) attributes {dimension_semantics = [#tpu.dimension_semantics<parallel>], iteration_bounds = array<i64: 1>, scalar_prefetch = 0 : i64, scratch_operands = 0 : i64, tpu.core_type = #tpu.core_type<tc>, window_params = [{transform_indices = @transform_0, window_bounds = array<i64: 8, 200>}, {pipeline_mode = #tpu.pipeline_mode<synchronous>, transform_indices = @transform_1, window_bounds = array<i64: 200, 64>}, {pipeline_mode = #tpu.pipeline_mode<synchronous>, transform_indices = @transform_2, window_bounds = array<i64: 1, 64>}, {pipeline_mode = #tpu.pipeline_mode<synchronous>, transform_indices = @transform_3, window_bounds = array<i64: 64, 10>}, {pipeline_mode = #tpu.pipeline_mode<synchronous>, transform_indices = @transform_4, window_bounds = array<i64: 1, 10>}, {transform_indices = @transform_5, window_bounds = array<i64: 8, 10>}]} {
    %c0 = arith.constant 0 : index
    %c0_0 = arith.constant 0 : index
    %0 = vector.load %arg1[%c0, %c0_0] : memref<8x200xf32, #tpu.memory_space<vmem>>, vector<8x200xf32>
    %c0_1 = arith.constant 0 : index
    %c0_2 = arith.constant 0 : index
    %1 = vector.load %arg2[%c0_1, %c0_2] : memref<200x64xf32, #tpu.memory_space<vmem>>, vector<200x64xf32>
    %cst = arith.constant dense<0.000000e+00> : vector<8x64xf32>
    %2 = tpu.matmul %0, %1, %cst {dimension_numbers = #tpu.dot_dimension_numbers<[1], [0], [0], [1], [0, 0, 1, 1], [], []>} : vector<8x200xf32>, vector<200x64xf32>, vector<8x64xf32> -> vector<8x64xf32>
    %c0_3 = arith.constant 0 : index
    %c0_4 = arith.constant 0 : index
    %3 = vector.load %arg3[%c0_3, %c0_4] : memref<1x64xf32, #tpu.memory_space<vmem>>, vector<1x64xf32>
    %4 = vector.broadcast %3 : vector<1x64xf32> to vector<8x64xf32>
    %5 = arith.addf %2, %4 : vector<8x64xf32>
    %cst_5 = arith.constant 0.000000e+00 : f32
    %6 = vector.broadcast %cst_5 : f32 to vector<8x64xf32>
    %7 = arith.maximumf %5, %6 : vector<8x64xf32>
    %c0_6 = arith.constant 0 : index
    %c0_7 = arith.constant 0 : index
    %8 = vector.load %arg4[%c0_6, %c0_7] : memref<64x10xf32, #tpu.memory_space<vmem>>, vector<64x10xf32>
    %cst_8 = arith.constant dense<0.000000e+00> : vector<8x10xf32>
    %9 = tpu.matmul %7, %8, %cst_8 {dimension_numbers = #tpu.dot_dimension_numbers<[1], [0], [0], [1], [0, 0, 1, 1], [], []>} : vector<8x64xf32>, vector<64x10xf32>, vector<8x10xf32> -> vector<8x10xf32>
    %c0_9 = arith.constant 0 : index
    %c0_10 = arith.constant 0 : index
    %10 = vector.load %arg5[%c0_9, %c0_10] : memref<1x10xf32, #tpu.memory_space<vmem>>, vector<1x10xf32>
    %11 = vector.broadcast %10 : vector<1x10xf32> to vector<8x10xf32>
    %12 = arith.addf %9, %11 : vector<8x10xf32>
    %c0_11 = arith.constant 0 : index
    %c0_12 = arith.constant 0 : index
    %13 = vector.load %arg6[%c0_11, %c0_12] : memref<8x10xf32, #tpu.memory_space<vmem>>, vector<8x10xf32>
    tpu.vector_store %arg6[%c0_11, %c0_12], %12 {strides = array<i32>} : memref<8x10xf32, #tpu.memory_space<vmem>>, vector<8x10xf32>,
    return
  }
  func.func @transform_0(%arg0: i32) -> (i32, i32) {
    %c0_i32 = arith.constant 0 : i32
    %c0_i32_0 = arith.constant 0 : i32
    return %arg0, %c0_i32 : i32, i32
  }
  func.func @transform_1(%arg0: i32) -> (i32, i32) {
    %c0_i32 = arith.constant 0 : i32
    %c0_i32_0 = arith.constant 0 : i32
    %c0_i32_1 = arith.constant 0 : i32
    return %c0_i32, %c0_i32_0 : i32, i32
  }
  func.func @transform_2(%arg0: i32) -> (i32, i32) {
    %c0_i32 = arith.constant 0 : i32
    %c0_i32_0 = arith.constant 0 : i32
    %c0_i32_1 = arith.constant 0 : i32
    return %c0_i32, %c0_i32_0 : i32, i32
  }
  func.func @transform_3(%arg0: i32) -> (i32, i32) {
    %c0_i32 = arith.constant 0 : i32
    %c0_i32_0 = arith.constant 0 : i32
    %c0_i32_1 = arith.constant 0 : i32
    return %c0_i32, %c0_i32_0 : i32, i32
  }
  func.func @transform_4(%arg0: i32) -> (i32, i32) {
    %c0_i32 = arith.constant 0 : i32
    %c0_i32_0 = arith.constant 0 : i32
    %c0_i32_1 = arith.constant 0 : i32
    return %c0_i32, %c0_i32_0 : i32, i32
  }
  func.func @transform_5(%arg0: i32) -> (i32, i32) {
    %c0_i32 = arith.constant 0 : i32
    %c0_i32_0 = arith.constant 0 : i32
    return %arg0, %c0_i32 : i32, i32
  }
}

</mosaic_0001>

<llo_original>
// kernel: tpu_custom_call.1
$region0: #{tpu_custom_call.1}
  #allocation0 [shape = 'u32[]', space=smem, size = 0x4, offset = 0x4, fixed_abs, tag = 'smem constant byte address 0x4 - core index']
  #allocation1 [shape = 'u32[144,128]{1,0:T(1,128)}', space=vmem, size = 0x12000, scoped, tag = 'internal scratch']
  %s0 = inlined_call_operand.vmem [shape: f32[4,200], index: 0, kind: input, shape index: {}]
  %s1 = inlined_call_operand.vmem [shape: f32[200,64], index: 1, kind: input, shape index: {}]
  %s2 = inlined_call_operand.vmem [shape: f32[1,64], index: 2, kind: input, shape index: {}]
  %s3 = inlined_call_operand.vmem [shape: f32[64,10], index: 3, kind: input, shape index: {}]
  %s4 = inlined_call_operand.vmem [shape: f32[1,10], index: 4, kind: input, shape index: {}]
  %s5 = inlined_call_operand.hbm [shape: f32[4,10], index: 5, kind: output, shape index: {}]
  %s6 = sld [smem:[#allocation0]]
  $region30: #{tpu_custom_call.1} parent=0
    _
  %s8 = ssub.s32 1, %s6
  %s9 = scalar_select 0, %s8, %s6
  $region1: #{tpu_custom_call.1} parent=0
    #allocation2 [shape = 'u8[4096]{0}', space=vmem, size = 0x1000, scoped, tag = 'output window, operand 0, single buffered']
    #allocation3 [shape = 's32[1]{0}', space=sflag, size = 0x4, scoped, tag = 'scoped memory for tpu_custom_call.1']
    %10 = vsyncpa [#allocation3], 0
    // Predicated region
    $region2: #{tpu_custom_call.1} parent=1 // pred_check
      _
    $region3: #{tpu_custom_call.1} parent=1 // pred_check_branch
      %12 = sbr.rel (0) target = $region5
    $region4: #{tpu_custom_call.1} parent=1 // pred_region
      _
    $region5: #{tpu_custom_call.1} parent=1 // pred_fallthru
      _
    // Predicated region
    $region6: #{tpu_custom_call.1} parent=1 // pred_check
      _
    $region7: #{tpu_custom_call.1} parent=1 // pred_check_branch
      %14 = sbr.rel (0) target = $region9
    $region8: #{tpu_custom_call.1} parent=1 // pred_region
      _
    $region9: #{tpu_custom_call.1} parent=1 // pred_fallthru
      _
    // Predicated region
    $region10: #{tpu_custom_call.1} parent=1 // pred_check
      _
    $region11: #{tpu_custom_call.1} parent=1 // pred_check_branch
      %16 = sbr.rel (0) target = $region13
    $region12: #{tpu_custom_call.1} parent=1 // pred_region
      _
    $region13: #{tpu_custom_call.1} parent=1 // pred_fallthru
      _
    // Predicated region
    $region14: #{tpu_custom_call.1} parent=1 // pred_check
      _
    $region15: #{tpu_custom_call.1} parent=1 // pred_check_branch
      %18 = sbr.rel (0) target = $region17
    $region16: #{tpu_custom_call.1} parent=1 // pred_region
      _
    $region17: #{tpu_custom_call.1} parent=1 // pred_fallthru
      _
    // Predicated region
    $region18: #{tpu_custom_call.1} parent=1 // pred_check
      _
    $region19: #{tpu_custom_call.1} parent=1 // pred_check_branch
      %20 = sbr.rel (0) target = $region21
    $region20: #{tpu_custom_call.1} parent=1 // pred_region
      _
    $region21: #{tpu_custom_call.1} parent=1 // pred_fallthru
      _
    %v21 = vld [vmem:[%s0] sm:$0xff]
    %v22 = vld [vmem:[%s0 + $0x8] sm:$0xff]
    %v23 = vld [vmem:[%s1] sm:$0xff]
    %v24 = vld [vmem:[%s1 + $0x8] sm:$0xff]
    %v25 = vld [vmem:[%s1 + $0x10] sm:$0xff]
    %v26 = vld [vmem:[%s1 + $0x18] sm:$0xff]
    %v27 = vld [vmem:[%s1 + $0x20] sm:$0xff]
    %v28 = vld [vmem:[%s1 + $0x28] sm:$0xff]
    %v29 = vld [vmem:[%s1 + $0x30] sm:$0xff]
    %v30 = vld [vmem:[%s1 + $0x38] sm:$0xff]
    %v31 = vld [vmem:[%s1 + $0x40] sm:$0xff]
    %v32 = vld [vmem:[%s1 + $0x48] sm:$0xff]
    %v33 = vld [vmem:[%s1 + $0x50] sm:$0xff]
    %v34 = vld [vmem:[%s1 + $0x58] sm:$0xff]
    %v35 = vld [vmem:[%s1 + $0x60] sm:$0xff]
    %v36 = vld [vmem:[%s1 + $0x68] sm:$0xff]
    %v37 = vld [vmem:[%s1 + $0x70] sm:$0xff]
    %v38 = vld [vmem:[%s1 + $0x78] sm:$0xff]
    %v39 = vld [vmem:[%s1 + $0x80] sm:$0xff]
    %v40 = vld [vmem:[%s1 + $0x88] sm:$0xff]
    %v41 = vld [vmem:[%s1 + $0x90] sm:$0xff]
    %v42 = vld [vmem:[%s1 + $0x98] sm:$0xff]
    %v43 = vld [vmem:[%s1 + $0xa0] sm:$0xff]
    %v44 = vld [vmem:[%s1 + $0xa8] sm:$0xff]
    %v45 = vld [vmem:[%s1 + $0xb0] sm:$0xff]
    %v46 = vld [vmem:[%s1 + $0xb8] sm:$0xff]
    %v47 = vld [vmem:[%s1 + $0xc0] sm:$0xff]
    %v48 = vld [vmem:[%s2] sm:$0x1]
    %v50 = vlaneseq
    %v51 = vshrl.u32 %v50, 7
    %v52 = vsub.s32 0, %v51
    %v53 = vrot.slane %v48, %v52
    %v57 = vcombine.low %v21, %v22
    %v58 = vcombine.high %v21, %v22
    %vm60 = vcmask 588800
    %v61 = vsel %vm60, %v58, 0
    %63 = vmatprep.subr.mxu0 0.0
    %64 = vmatpush1.msra.mxu0 %v23
    %65 = vmatprep.subr.mxu0 0.0
    %66 = vmatpush1.msra.mxu0 %v24
    %67 = vmatprep.subr.mxu0 0.0
    %68 = vmatpush1.msra.mxu0 %v25
    %69 = vmatprep.subr.mxu0 0.0
    %70 = vmatpush1.msra.mxu0 %v26
    %71 = vmatprep.subr.mxu0 0.0
    %72 = vmatpush1.msra.mxu0 %v27
    %73 = vmatprep.subr.mxu0 0.0
    %74 = vmatpush1.msra.mxu0 %v28
    %75 = vmatprep.subr.mxu0 0.0
    %76 = vmatpush1.msra.mxu0 %v29
    %77 = vmatprep.subr.mxu0 0.0
    %78 = vmatpush1.msra.mxu0 %v30
    %79 = vmatprep.subr.mxu0 0.0
    %80 = vmatpush1.msra.mxu0 %v31
    %81 = vmatprep.subr.mxu0 0.0
    %82 = vmatpush1.msra.mxu0 %v32
    %83 = vmatprep.subr.mxu0 0.0
    %84 = vmatpush1.msra.mxu0 %v33
    %85 = vmatprep.subr.mxu0 0.0
    %86 = vmatpush1.msra.mxu0 %v34
    %87 = vmatprep.subr.mxu0 0.0
    %88 = vmatpush1.msra.mxu0 %v35
    %89 = vmatprep.subr.mxu0 0.0
    %90 = vmatpush1.msra.mxu0 %v36
    %91 = vmatprep.subr.mxu0 0.0
    %92 = vmatpush1.msra.mxu0 %v37
    %93 = vmatprep.subr.mxu0 0.0
    %94 = vmatpush1.msra.mxu0 %v38
    %95 = vmatprep.subr.mxu0 0.0
    %96 = vmatpush1.msra.mxu0 %v39
    %97 = vmatprep.subr.mxu0 0.0
    %98 = vmatpush1.msra.mxu0 %v40
    %99 = vmatprep.subr.mxu0 0.0
    %100 = vmatpush1.msra.mxu0 %v41
    %101 = vmatprep.subr.mxu0 0.0
    %102 = vmatpush1.msra.mxu0 %v42
    %103 = vmatprep.subr.mxu0 0.0
    %104 = vmatpush1.msra.mxu0 %v43
    %105 = vmatprep.subr.mxu0 0.0
    %106 = vmatpush1.msra.mxu0 %v44
    %107 = vmatprep.subr.mxu0 0.0
    %108 = vmatpush1.msra.mxu0 %v45
    %109 = vmatprep.subr.mxu0 0.0
    %110 = vmatpush1.msra.mxu0 %v46
    %111 = vmatprep.subr.mxu0 0.0
    %112 = vmatpush1.msra.mxu0 %v47
    %113 = vmatprep.subr.mxu0 0.0
    %114 = vmatpush1.msra.mxu0 0.0
    %115 = vmatprep.subr.mxu0 0.0
    %116 = vmatpush1.msra.mxu0 0.0
    %117 = vmatprep.subr.mxu0 0.0
    %118 = vmatpush1.msra.mxu0 0.0
    %119 = vmatprep.subr.mxu0 0.0
    %120 = vmatpush1.msra.mxu0 0.0
    %121 = vmatprep.subr.mxu0 0.0
    %122 = vmatpush1.msra.mxu0 0.0
    %123 = vmatprep.subr.mxu0 0.0
    %124 = vmatpush1.msra.mxu0 0.0
    %125 = vmatprep.subr.mxu0 0.0
    %126 = vmatpush1.msra.mxu0 0.0
    %127 = vmatprep.mubr.f32.mxu0 %v61
    %128 = vmatmul.mubr.f32.gmra.mrb[0].mxu0 %v57
    %v129 = vpop.f32.mrb[0].mxu0
    %v130 = vadd.f32 %v53, %v129
    %v131 = vpop.f32.mrb[0].mxu0
    %132 = vdwg.mxu0
    %v133 = vmax.f32 %v130, 0.0
    %v134 = vld [vmem:[%s3] sm:$0xff]
    %v135 = vld [vmem:[%s3 + $0x8] sm:$0xff]
    %v136 = vld [vmem:[%s3 + $0x10] sm:$0xff]
    %v137 = vld [vmem:[%s3 + $0x18] sm:$0xff]
    %v138 = vld [vmem:[%s3 + $0x20] sm:$0xff]
    %v139 = vld [vmem:[%s3 + $0x28] sm:$0xff]
    %v140 = vld [vmem:[%s3 + $0x30] sm:$0xff]
    %v141 = vld [vmem:[%s3 + $0x38] sm:$0xff]
    %v142 = vld [vmem:[%s4] sm:$0x1]
    %v144 = vlaneseq
    %v145 = vshrl.u32 %v144, 7
    %v146 = vsub.s32 0, %v145
    %v147 = vrot.slane %v142, %v146
    %vm149 = vcmask 523264
    %v151 = vsel %vm149, %v133, 0
    %153 = vmatprep.subr.mxu0 0.0
    %154 = vmatpush1.msra.mxu0 %v134
    %155 = vmatprep.subr.mxu0 0.0
    %156 = vmatpush1.msra.mxu0 %v135
    %157 = vmatprep.subr.mxu0 0.0
    %158 = vmatpush1.msra.mxu0 %v136
    %159 = vmatprep.subr.mxu0 0.0
    %160 = vmatpush1.msra.mxu0 %v137
    %161 = vmatprep.subr.mxu0 0.0
    %162 = vmatpush1.msra.mxu0 %v138
    %163 = vmatprep.subr.mxu0 0.0
    %164 = vmatpush1.msra.mxu0 %v139
    %165 = vmatprep.subr.mxu0 0.0
    %166 = vmatpush1.msra.mxu0 %v140
    %167 = vmatprep.subr.mxu0 0.0
    %168 = vmatpush1.msra.mxu0 %v141
    %169 = vmatprep.subr.mxu0 0.0
    %170 = vmatpush1.msra.mxu0 0.0
    %171 = vmatprep.subr.mxu0 0.0
    %172 = vmatpush1.msra.mxu0 0.0
    %173 = vmatprep.subr.mxu0 0.0
    %174 = vmatpush1.msra.mxu0 0.0
    %175 = vmatprep.subr.mxu0 0.0
    %176 = vmatpush1.msra.mxu0 0.0
    %177 = vmatprep.subr.mxu0 0.0
    %178 = vmatpush1.msra.mxu0 0.0
    %179 = vmatprep.subr.mxu0 0.0
    %180 = vmatpush1.msra.mxu0 0.0
    %181 = vmatprep.subr.mxu0 0.0
    %182 = vmatpush1.msra.mxu0 0.0
    %183 = vmatprep.subr.mxu0 0.0
    %184 = vmatpush1.msra.mxu0 0.0
    %185 = vmatprep.subr.mxu0 0.0
    %186 = vmatpush1.msra.mxu0 0.0
    %187 = vmatprep.subr.mxu0 0.0
    %188 = vmatpush1.msra.mxu0 0.0
    %189 = vmatprep.subr.mxu0 0.0
    %190 = vmatpush1.msra.mxu0 0.0
    %191 = vmatprep.subr.mxu0 0.0
    %192 = vmatpush1.msra.mxu0 0.0
    %193 = vmatprep.subr.mxu0 0.0
    %194 = vmatpush1.msra.mxu0 0.0
    %195 = vmatprep.subr.mxu0 0.0
    %196 = vmatpush1.msra.mxu0 0.0
    %197 = vmatprep.subr.mxu0 0.0
    %198 = vmatpush1.msra.mxu0 0.0
    %199 = vmatprep.subr.mxu0 0.0
    %200 = vmatpush1.msra.mxu0 0.0
    %201 = vmatprep.subr.mxu0 0.0
    %202 = vmatpush1.msra.mxu0 0.0
    %203 = vmatprep.subr.mxu0 0.0
    %204 = vmatpush1.msra.mxu0 0.0
    %205 = vmatprep.subr.mxu0 0.0
    %206 = vmatpush1.msra.mxu0 0.0
    %207 = vmatprep.subr.mxu0 0.0
    %208 = vmatpush1.msra.mxu0 0.0
    %209 = vmatprep.subr.mxu0 0.0
    %210 = vmatpush1.msra.mxu0 0.0
    %211 = vmatprep.subr.mxu0 0.0
    %212 = vmatpush1.msra.mxu0 0.0
    %213 = vmatprep.subr.mxu0 0.0
    %214 = vmatpush1.msra.mxu0 0.0
    %215 = vmatprep.subr.mxu0 0.0
    %216 = vmatpush1.msra.mxu0 0.0
    %217 = vmatprep.mubr.f32.mxu0 0.0
    %218 = vmatmul.mubr.f32.gmra.mrb[0].mxu0 %v151
    %v219 = vpop.f32.mrb[0].mxu0
    %v220 = vadd.f32 %v147, %v219
    %v221 = vpop.f32.mrb[0].mxu0
    %222 = vdwg.mxu0
    %vm223 = vcmask 80896
    %224 = vst.msk [vmem:[#allocation2] sm:$0xff] %vm223, %v220
    // Predicated region
    $region22: #{tpu_custom_call.1} parent=1 // pred_check
      _
    $region23: #{tpu_custom_call.1} parent=1 // pred_check_branch
      %226 = sbr.rel (0) target = $region25
    $region24: #{tpu_custom_call.1} parent=1 // pred_region
      %s228 = ssub.s32 128, 64
      %229 = vsyncadd [#allocation3], %s228
      %s230 = sshll.u32 [#allocation2], 4
      %s231 = int_to_ptr.vmem [resolvable:$true] %s230
      %236 = dma.vmem_to_hbm [thread:$0]  %s231, 64, %s5, [#allocation3], 64, 64, 4
    $region25: #{tpu_custom_call.1} parent=1 // pred_fallthru
      _
    // Predicated region
    $region26: #{tpu_custom_call.1} parent=1 // pred_check
      _
    $region27: #{tpu_custom_call.1} parent=1 // pred_check_branch
      %238 = sbr.rel (0) target = $region29
    $region28: #{tpu_custom_call.1} parent=1 // pred_region
      %239 = dma.done [#allocation3], 128
    $region29: #{tpu_custom_call.1} parent=1 // pred_fallthru
      _
    %240 = vsyncpa [#allocation3], 1

</llo_original>
